<compile_context>
chip_gen: v5e
topology: v5e:2x2
jax: 0.10.0
libtpu: 0.0.40
codegen_flags: <defaults>
</compile_context>

<pallas_src>
import functools

import jax
import jax.numpy as jnp
from jax.experimental import pallas as pl
from jax.experimental.pallas import tpu as pltpu

_LANE = 128


def _round_up(n, m):
    return ((n + m - 1) // m) * m


def _mlp_kernel(x_ref,
                w1_ref, b1_ref,
                w2_ref, b2_ref,
                w3_ref, b3_ref,
                w4_ref, b4_ref,
                o_ref):
    # Whole hot path (4 matmuls + bias + ReLU) runs on the MXU/VPU in VMEM.
    x = x_ref[...]
    h = jnp.dot(x, w1_ref[...], preferred_element_type=jnp.float32) + b1_ref[...]
    h = jnp.maximum(h, 0.0)
    h = jnp.dot(h, w2_ref[...], preferred_element_type=jnp.float32) + b2_ref[...]
    h = jnp.maximum(h, 0.0)
    h = jnp.dot(h, w3_ref[...], preferred_element_type=jnp.float32) + b3_ref[...]
    h = jnp.maximum(h, 0.0)
    logits = jnp.dot(h, w4_ref[...], preferred_element_type=jnp.float32) + b4_ref[...]
    o_ref[...] = logits.astype(o_ref.dtype)


def init_policy_params(key, input_size, num_actions):
    """Deterministic init mimicking PyTorch nn.Linear default (U[-1/sqrt(fan_in), +]).

    Weights stored as (in, out) == W.T of the PyTorch (out, in) weight.
    """
    dims = [(input_size, 64), (64, 128), (128, 64), (64, num_actions)]
    params = {}
    for idx, (fan_in, fan_out) in enumerate(dims, start=1):
        key, kw, kb = jax.random.split(key, 3)
        bound = 1.0 / float(fan_in) ** 0.5
        params[f"w{idx}"] = jax.random.uniform(
            kw, (fan_in, fan_out), jnp.float32, -bound, bound)
        params[f"b{idx}"] = jax.random.uniform(
            kb, (1, fan_out), jnp.float32, -bound, bound)
    return params


def pad_policy_params(params):
    """Zero-pad every weight/bias so all feature dims are multiples of 128 lanes.

    Done once, outside the hot path.  Zero rows/cols leave the matmul results
    unchanged; padded hidden units stay exactly 0 through bias+ReLU, and padded
    output columns are exactly 0 (sliced off in the wrapper).
    """
    padded = {}
    for idx in range(1, 5):
        w = params[f"w{idx}"]
        b = params[f"b{idx}"]
        fi, fo = w.shape
        fi_p, fo_p = _round_up(fi, _LANE), _round_up(fo, _LANE)
        padded[f"w{idx}"] = jnp.pad(w, ((0, fi_p - fi), (0, fo_p - fo)))
        padded[f"b{idx}"] = jnp.pad(b, ((0, 0), (0, fo_p - fo)))
    return padded


def _auto_block_b(B):
    # Small batches: one lane-dense tile (no point splitting).
    if B <= 16:
        return _round_up(B, 8)
    # Otherwise use big tiles (amortize ~0.35us/step pipeline overhead) but keep
    # >= 2 grid steps so the parallel batch axis can shard across both v7x TCs.
    return min(1024, _round_up(pl.cdiv(B, 2), 8))


@functools.partial(jax.jit, static_argnames=("num_actions", "block_b"))
def policy_forward(x, padded_params, num_actions, block_b=None):
    """x: (B, input_size) f32.  padded_params: output of pad_policy_params."""
    B, in_features = x.shape
    p = padded_params
    in_pad = p["w1"].shape[0]
    out_pad = p["w4"].shape[1]

    if block_b is None:
        block_b = _auto_block_b(B)

    # Lane-dense input: pad features up to the padded weight width (zeros).
    if in_features != in_pad:
        x = jnp.pad(x, ((0, 0), (0, in_pad - in_features)))

    grid = (pl.cdiv(B, block_b),)

    def batch_map(i):
        return (i, 0)

    def full_map(i):
        return (0, 0)

    in_specs = [
        pl.BlockSpec((block_b, in_pad), batch_map),   # x
        pl.BlockSpec(p["w1"].shape, full_map),        # w1
        pl.BlockSpec(p["b1"].shape, full_map),        # b1
        pl.BlockSpec(p["w2"].shape, full_map),        # w2
        pl.BlockSpec(p["b2"].shape, full_map),        # b2
        pl.BlockSpec(p["w3"].shape, full_map),        # w3
        pl.BlockSpec(p["b3"].shape, full_map),        # b3
        pl.BlockSpec(p["w4"].shape, full_map),        # w4
        pl.BlockSpec(p["b4"].shape, full_map),        # b4
    ]
    out_specs = pl.BlockSpec((block_b, out_pad), batch_map)

    out_padded = pl.pallas_call(
        _mlp_kernel,
        out_shape=jax.ShapeDtypeStruct((B, out_pad), jnp.float32),
        grid=grid,
        in_specs=in_specs,
        out_specs=out_specs,
        compiler_params=pltpu.CompilerParams(
            dimension_semantics=("parallel",)),
    )(x,
      p["w1"], p["b1"],
      p["w2"], p["b2"],
      p["w3"], p["b3"],
      p["w4"], p["b4"])

    # Slice back to the true number of actions (fused by XLA).
    return out_padded[:, :num_actions]


def policy_forward_ref(x, params):
    """Pure-JAX reference of the PyTorch forward, for correctness checking."""
    h = jax.nn.relu(x @ params["w1"] + params["b1"])
    h = jax.nn.relu(h @ params["w2"] + params["b2"])
    h = jax.nn.relu(h @ params["w3"] + params["b3"])
    return h @ params["w4"] + params["b4"]


if __name__ == "__main__":
    input_size = 32
    num_actions = 8

    key = jax.random.PRNGKey(0)
    key, kp = jax.random.split(key)
    params = init_policy_params(kp, input_size, num_actions)
    padded_params = pad_policy_params(params)

    # Small single-tile batch and a ragged multi-tile batch (exercises the
    # parallel grid axis + masked tail handling).
    for batch in (8, 40):
        key, kx = jax.random.split(key)
        x = jax.random.normal(kx, (batch, input_size), jnp.float32)

        logits = policy_forward(x, padded_params, num_actions)
        jax.block_until_ready(logits)

        ref = policy_forward_ref(x, params)
        assert logits.shape == (batch, num_actions)
        assert jnp.allclose(logits, ref, atol=1e-4, rtol=1e-4), \
            f"mismatch vs reference at batch={batch}"

    print("KERNEL_OK")
</pallas_src>

<mosaic_0001>
module attributes {stable_mosaic.version = 11 : i64} {
  func.func @_mlp_kernel(%arg0: i32, %arg1: memref<8x128xf32, #tpu.memory_space<vmem>>, %arg2: memref<128x128xf32, #tpu.memory_space<vmem>>, %arg3: memref<1x128xf32, #tpu.memory_space<vmem>>, %arg4: memref<128x128xf32, #tpu.memory_space<vmem>>, %arg5: memref<1x128xf32, #tpu.memory_space<vmem>>, %arg6: memref<128x128xf32, #tpu.memory_space<vmem>>, %arg7: memref<1x128xf32, #tpu.memory_space<vmem>>, %arg8: memref<128x128xf32, #tpu.memory_space<vmem>>, %arg9: memref<1x128xf32, #tpu.memory_space<vmem>>, %arg10: memref<8x128xf32, #tpu.memory_space<vmem>>) attributes {dimension_semantics = [#tpu.dimension_semantics<parallel>], iteration_bounds = array<i64: 1>, scalar_prefetch = 0 : i64, scratch_operands = 0 : i64, tpu.core_type = #tpu.core_type<tc>, window_params = [{transform_indices = @transform_0, window_bounds = array<i64: 8, 128>}, {pipeline_mode = #tpu.pipeline_mode<synchronous>, transform_indices = @transform_1, window_bounds = array<i64: 128, 128>}, {pipeline_mode = #tpu.pipeline_mode<synchronous>, transform_indices = @transform_2, window_bounds = array<i64: 1, 128>}, {pipeline_mode = #tpu.pipeline_mode<synchronous>, transform_indices = @transform_3, window_bounds = array<i64: 128, 128>}, {pipeline_mode = #tpu.pipeline_mode<synchronous>, transform_indices = @transform_4, window_bounds = array<i64: 1, 128>}, {pipeline_mode = #tpu.pipeline_mode<synchronous>, transform_indices = @transform_5, window_bounds = array<i64: 128, 128>}, {pipeline_mode = #tpu.pipeline_mode<synchronous>, transform_indices = @transform_6, window_bounds = array<i64: 1, 128>}, {pipeline_mode = #tpu.pipeline_mode<synchronous>, transform_indices = @transform_7, window_bounds = array<i64: 128, 128>}, {pipeline_mode = #tpu.pipeline_mode<synchronous>, transform_indices = @transform_8, window_bounds = array<i64: 1, 128>}, {transform_indices = @transform_9, window_bounds = array<i64: 8, 128>}]} {
    %c0 = arith.constant 0 : index
    %c0_0 = arith.constant 0 : index
    %0 = vector.load %arg1[%c0, %c0_0] : memref<8x128xf32, #tpu.memory_space<vmem>>, vector<8x128xf32>
    %c0_1 = arith.constant 0 : index
    %c0_2 = arith.constant 0 : index
    %1 = vector.load %arg2[%c0_1, %c0_2] : memref<128x128xf32, #tpu.memory_space<vmem>>, vector<128x128xf32>
    %cst = arith.constant dense<0.000000e+00> : vector<8x128xf32>
    %2 = tpu.matmul %0, %1, %cst {dimension_numbers = #tpu.dot_dimension_numbers<[1], [0], [0], [1], [0, 0, 1, 1], [], []>} : vector<8x128xf32>, vector<128x128xf32>, vector<8x128xf32> -> vector<8x128xf32>
    %c0_3 = arith.constant 0 : index
    %c0_4 = arith.constant 0 : index
    %3 = vector.load %arg3[%c0_3, %c0_4] : memref<1x128xf32, #tpu.memory_space<vmem>>, vector<1x128xf32>
    %4 = vector.broadcast %3 : vector<1x128xf32> to vector<8x128xf32>
    %5 = arith.addf %2, %4 : vector<8x128xf32>
    %cst_5 = arith.constant 0.000000e+00 : f32
    %6 = vector.broadcast %cst_5 : f32 to vector<8x128xf32>
    %7 = arith.maximumf %5, %6 : vector<8x128xf32>
    %c0_6 = arith.constant 0 : index
    %c0_7 = arith.constant 0 : index
    %8 = vector.load %arg4[%c0_6, %c0_7] : memref<128x128xf32, #tpu.memory_space<vmem>>, vector<128x128xf32>
    %cst_8 = arith.constant dense<0.000000e+00> : vector<8x128xf32>
    %9 = tpu.matmul %7, %8, %cst_8 {dimension_numbers = #tpu.dot_dimension_numbers<[1], [0], [0], [1], [0, 0, 1, 1], [], []>} : vector<8x128xf32>, vector<128x128xf32>, vector<8x128xf32> -> vector<8x128xf32>
    %c0_9 = arith.constant 0 : index
    %c0_10 = arith.constant 0 : index
    %10 = vector.load %arg5[%c0_9, %c0_10] : memref<1x128xf32, #tpu.memory_space<vmem>>, vector<1x128xf32>
    %11 = vector.broadcast %10 : vector<1x128xf32> to vector<8x128xf32>
    %12 = arith.addf %9, %11 : vector<8x128xf32>
    %cst_11 = arith.constant 0.000000e+00 : f32
    %13 = vector.broadcast %cst_11 : f32 to vector<8x128xf32>
    %14 = arith.maximumf %12, %13 : vector<8x128xf32>
    %c0_12 = arith.constant 0 : index
    %c0_13 = arith.constant 0 : index
    %15 = vector.load %arg6[%c0_12, %c0_13] : memref<128x128xf32, #tpu.memory_space<vmem>>, vector<128x128xf32>
    %cst_14 = arith.constant dense<0.000000e+00> : vector<8x128xf32>
    %16 = tpu.matmul %14, %15, %cst_14 {dimension_numbers = #tpu.dot_dimension_numbers<[1], [0], [0], [1], [0, 0, 1, 1], [], []>} : vector<8x128xf32>, vector<128x128xf32>, vector<8x128xf32> -> vector<8x128xf32>
    %c0_15 = arith.constant 0 : index
    %c0_16 = arith.constant 0 : index
    %17 = vector.load %arg7[%c0_15, %c0_16] : memref<1x128xf32, #tpu.memory_space<vmem>>, vector<1x128xf32>
    %18 = vector.broadcast %17 : vector<1x128xf32> to vector<8x128xf32>
    %19 = arith.addf %16, %18 : vector<8x128xf32>
    %cst_17 = arith.constant 0.000000e+00 : f32
    %20 = vector.broadcast %cst_17 : f32 to vector<8x128xf32>
    %21 = arith.maximumf %19, %20 : vector<8x128xf32>
    %c0_18 = arith.constant 0 : index
    %c0_19 = arith.constant 0 : index
    %22 = vector.load %arg8[%c0_18, %c0_19] : memref<128x128xf32, #tpu.memory_space<vmem>>, vector<128x128xf32>
    %cst_20 = arith.constant dense<0.000000e+00> : vector<8x128xf32>
    %23 = tpu.matmul %21, %22, %cst_20 {dimension_numbers = #tpu.dot_dimension_numbers<[1], [0], [0], [1], [0, 0, 1, 1], [], []>} : vector<8x128xf32>, vector<128x128xf32>, vector<8x128xf32> -> vector<8x128xf32>
    %c0_21 = arith.constant 0 : index
    %c0_22 = arith.constant 0 : index
    %24 = vector.load %arg9[%c0_21, %c0_22] : memref<1x128xf32, #tpu.memory_space<vmem>>, vector<1x128xf32>
    %25 = vector.broadcast %24 : vector<1x128xf32> to vector<8x128xf32>
    %26 = arith.addf %23, %25 : vector<8x128xf32>
    %c0_23 = arith.constant 0 : index
    %c0_24 = arith.constant 0 : index
    %27 = vector.load %arg10[%c0_23, %c0_24] : memref<8x128xf32, #tpu.memory_space<vmem>>, vector<8x128xf32>
    tpu.vector_store %arg10[%c0_23, %c0_24], %26 {strides = array<i32>} : memref<8x128xf32, #tpu.memory_space<vmem>>, vector<8x128xf32>,
    return
  }
  func.func @transform_0(%arg0: i32) -> (i32, i32) {
    %c0_i32 = arith.constant 0 : i32
    %c0_i32_0 = arith.constant 0 : i32
    return %arg0, %c0_i32 : i32, i32
  }
  func.func @transform_1(%arg0: i32) -> (i32, i32) {
    %c0_i32 = arith.constant 0 : i32
    %c0_i32_0 = arith.constant 0 : i32
    %c0_i32_1 = arith.constant 0 : i32
    return %c0_i32, %c0_i32_0 : i32, i32
  }
  func.func @transform_2(%arg0: i32) -> (i32, i32) {
    %c0_i32 = arith.constant 0 : i32
    %c0_i32_0 = arith.constant 0 : i32
    %c0_i32_1 = arith.constant 0 : i32
    return %c0_i32, %c0_i32_0 : i32, i32
  }
  func.func @transform_3(%arg0: i32) -> (i32, i32) {
    %c0_i32 = arith.constant 0 : i32
    %c0_i32_0 = arith.constant 0 : i32
    %c0_i32_1 = arith.constant 0 : i32
    return %c0_i32, %c0_i32_0 : i32, i32
  }
  func.func @transform_4(%arg0: i32) -> (i32, i32) {
    %c0_i32 = arith.constant 0 : i32
    %c0_i32_0 = arith.constant 0 : i32
    %c0_i32_1 = arith.constant 0 : i32
    return %c0_i32, %c0_i32_0 : i32, i32
  }
  func.func @transform_5(%arg0: i32) -> (i32, i32) {
    %c0_i32 = arith.constant 0 : i32
    %c0_i32_0 = arith.constant 0 : i32
    %c0_i32_1 = arith.constant 0 : i32
    return %c0_i32, %c0_i32_0 : i32, i32
  }
  func.func @transform_6(%arg0: i32) -> (i32, i32) {
    %c0_i32 = arith.constant 0 : i32
    %c0_i32_0 = arith.constant 0 : i32
    %c0_i32_1 = arith.constant 0 : i32
    return %c0_i32, %c0_i32_0 : i32, i32
  }
  func.func @transform_7(%arg0: i32) -> (i32, i32) {
    %c0_i32 = arith.constant 0 : i32
    %c0_i32_0 = arith.constant 0 : i32
    %c0_i32_1 = arith.constant 0 : i32
    return %c0_i32, %c0_i32_0 : i32, i32
  }
  func.func @transform_8(%arg0: i32) -> (i32, i32) {
    %c0_i32 = arith.constant 0 : i32
    %c0_i32_0 = arith.constant 0 : i32
    %c0_i32_1 = arith.constant 0 : i32
    return %c0_i32, %c0_i32_0 : i32, i32
  }
  func.func @transform_9(%arg0: i32) -> (i32, i32) {
    %c0_i32 = arith.constant 0 : i32
    %c0_i32_0 = arith.constant 0 : i32
    return %arg0, %c0_i32 : i32, i32
  }
}

</mosaic_0001>

<llo_original>
// kernel: policy_forward.1
$region0: #{policy_forward.1}
  #allocation0 [shape = 'u32[]', space=smem, size = 0x4, offset = 0x4, fixed_abs, tag = 'smem constant byte address 0x4 - core index']
  #allocation1 [shape = 'u32[72,128]{1,0:T(1,128)}', space=vmem, size = 0x9000, scoped, tag = 'internal scratch']
  %s0 = inlined_call_operand.vmem [shape: f32[8,128], index: 0, kind: input, shape index: {}]
  %s1 = inlined_call_operand.hbm [shape: f32[128,128], index: 1, kind: input, shape index: {}]
  %s2 = inlined_call_operand.vmem [shape: f32[1,128], index: 2, kind: input, shape index: {}]
  %s3 = inlined_call_operand.hbm [shape: f32[128,128], index: 3, kind: input, shape index: {}]
  %s4 = inlined_call_operand.vmem [shape: f32[1,128], index: 4, kind: input, shape index: {}]
  %s5 = inlined_call_operand.hbm [shape: f32[128,128], index: 5, kind: input, shape index: {}]
  %s6 = inlined_call_operand.vmem [shape: f32[1,128], index: 6, kind: input, shape index: {}]
  %s7 = inlined_call_operand.hbm [shape: f32[128,128], index: 7, kind: input, shape index: {}]
  %s8 = inlined_call_operand.vmem [shape: f32[1,128], index: 8, kind: input, shape index: {}]
  %s9 = inlined_call_operand.hbm [shape: f32[8,128], index: 9, kind: output, shape index: {}]
  %s10 = sld [smem:[#allocation0]]
  $region62: #{policy_forward.1} parent=0
    _
  %s12 = ssub.s32 1, %s10
  %s13 = scalar_select 0, %s12, %s10
  $region1: #{policy_forward.1} parent=0
    #allocation2 [shape = 'u8[65536]{0}', space=vmem, size = 0x10000, scoped, tag = 'input window, operand 1, single buffered']
    #allocation3 [shape = 's32[1]{0}', space=sflag, size = 0x4, scoped, tag = 'scoped memory for policy_forward.1']
    #allocation4 [shape = 's32[1]{0}', space=sflag, size = 0x4, scoped, tag = 'scoped memory for policy_forward.1']
    #allocation5 [shape = 'u8[65536]{0}', space=vmem, size = 0x10000, scoped, tag = 'input window, operand 3, single buffered']
    #allocation6 [shape = 's32[1]{0}', space=sflag, size = 0x4, scoped, tag = 'scoped memory for policy_forward.1']
    #allocation7 [shape = 'u8[65536]{0}', space=vmem, size = 0x10000, scoped, tag = 'input window, operand 5, single buffered']
    #allocation8 [shape = 'u8[65536]{0}', space=vmem, size = 0x10000, scoped, tag = 'input window, operand 7, single buffered']
    #allocation9 [shape = 's32[1]{0}', space=sflag, size = 0x4, scoped, tag = 'scoped memory for policy_forward.1']
    #allocation10 [shape = 'u8[4096]{0}', space=vmem, size = 0x1000, scoped, tag = 'output window, operand 0, single buffered']
    %14 = vsyncpa [#allocation3], 0
    %15 = vsyncpa [#allocation6], 0
    %16 = vsyncpa [#allocation9], 0
    %17 = vsyncpa [#allocation4], 0
    // Predicated region
    $region2: #{policy_forward.1} parent=1 // pred_check
      _
    $region3: #{policy_forward.1} parent=1 // pred_check_branch
      %19 = sbr.rel (0) target = $region5
    $region4: #{policy_forward.1} parent=1 // pred_region
      _
    $region5: #{policy_forward.1} parent=1 // pred_fallthru
      _
    // Predicated region
    $region6: #{policy_forward.1} parent=1 // pred_check
      _
    $region7: #{policy_forward.1} parent=1 // pred_check_branch
      %21 = sbr.rel (0) target = $region9
    $region8: #{policy_forward.1} parent=1 // pred_region
      %23 = vsyncadd [#allocation3], 0
      %s24 = sshll.u32 %s1, 4
      %s25 = int_to_ptr.hbm [resolvable:$true] %s24
      %s26 = sshll.u32 [#allocation2], 4
      %s27 = int_to_ptr.vmem [resolvable:$true] %s26
      %32 = dma.hbm_to_vmem [thread:$0]  %s25, 2048, %s27, [#allocation3], 128, 128, 8
    $region9: #{policy_forward.1} parent=1 // pred_fallthru
      _
    // Predicated region
    $region10: #{policy_forward.1} parent=1 // pred_check
      _
    $region11: #{policy_forward.1} parent=1 // pred_check_branch
      %34 = sbr.rel (0) target = $region13
    $region12: #{policy_forward.1} parent=1 // pred_region
      _
    $region13: #{policy_forward.1} parent=1 // pred_fallthru
      _
    // Predicated region
    $region14: #{policy_forward.1} parent=1 // pred_check
      _
    $region15: #{policy_forward.1} parent=1 // pred_check_branch
      %36 = sbr.rel (0) target = $region17
    $region16: #{policy_forward.1} parent=1 // pred_region
      %38 = vsyncadd [#allocation6], 0
      %s39 = sshll.u32 %s3, 4
      %s40 = int_to_ptr.hbm [resolvable:$true] %s39
      %s41 = sshll.u32 [#allocation5], 4
      %s42 = int_to_ptr.vmem [resolvable:$true] %s41
      %47 = dma.hbm_to_vmem [thread:$0]  %s40, 2048, %s42, [#allocation6], 128, 128, 8
    $region17: #{policy_forward.1} parent=1 // pred_fallthru
      _
    // Predicated region
    $region18: #{policy_forward.1} parent=1 // pred_check
      _
    $region19: #{policy_forward.1} parent=1 // pred_check_branch
      %49 = sbr.rel (0) target = $region21
    $region20: #{policy_forward.1} parent=1 // pred_region
      _
    $region21: #{policy_forward.1} parent=1 // pred_fallthru
      _
    // Predicated region
    $region22: #{policy_forward.1} parent=1 // pred_check
      _
    $region23: #{policy_forward.1} parent=1 // pred_check_branch
      %51 = sbr.rel (0) target = $region25
    $region24: #{policy_forward.1} parent=1 // pred_region
      %53 = vsyncadd [#allocation6], 0
      %s54 = sshll.u32 %s5, 4
      %s55 = int_to_ptr.hbm [resolvable:$true] %s54
      %s56 = sshll.u32 [#allocation7], 4
      %s57 = int_to_ptr.vmem [resolvable:$true] %s56
      %62 = dma.hbm_to_vmem [thread:$0]  %s55, 2048, %s57, [#allocation6], 128, 128, 8
    $region25: #{policy_forward.1} parent=1 // pred_fallthru
      _
    // Predicated region
    $region26: #{policy_forward.1} parent=1 // pred_check
      _
    $region27: #{policy_forward.1} parent=1 // pred_check_branch
      %64 = sbr.rel (0) target = $region29
    $region28: #{policy_forward.1} parent=1 // pred_region
      _
    $region29: #{policy_forward.1} parent=1 // pred_fallthru
      _
    // Predicated region
    $region30: #{policy_forward.1} parent=1 // pred_check
      _
    $region31: #{policy_forward.1} parent=1 // pred_check_branch
      %66 = sbr.rel (0) target = $region33
    $region32: #{policy_forward.1} parent=1 // pred_region
      %68 = vsyncadd [#allocation9], 0
      %s69 = sshll.u32 %s7, 4
      %s70 = int_to_ptr.hbm [resolvable:$true] %s69
      %s71 = sshll.u32 [#allocation8], 4
      %s72 = int_to_ptr.vmem [resolvable:$true] %s71
      %77 = dma.hbm_to_vmem [thread:$0]  %s70, 2048, %s72, [#allocation9], 128, 128, 8
    $region33: #{policy_forward.1} parent=1 // pred_fallthru
      _
    // Predicated region
    $region34: #{policy_forward.1} parent=1 // pred_check
      _
    $region35: #{policy_forward.1} parent=1 // pred_check_branch
      %79 = sbr.rel (0) target = $region37
    $region36: #{policy_forward.1} parent=1 // pred_region
      _
    $region37: #{policy_forward.1} parent=1 // pred_fallthru
      _
    // Predicated region
    $region38: #{policy_forward.1} parent=1 // pred_check
      _
    $region39: #{policy_forward.1} parent=1 // pred_check_branch
      %81 = sbr.rel (0) target = $region41
    $region40: #{policy_forward.1} parent=1 // pred_region
      %83 = dma.done [#allocation3], 2048
    $region41: #{policy_forward.1} parent=1 // pred_fallthru
      _
    // Predicated region
    $region42: #{policy_forward.1} parent=1 // pred_check
      _
    $region43: #{policy_forward.1} parent=1 // pred_check_branch
      %85 = sbr.rel (0) target = $region45
    $region44: #{policy_forward.1} parent=1 // pred_region
      %87 = dma.done [#allocation6], 2048
    $region45: #{policy_forward.1} parent=1 // pred_fallthru
      _
    // Predicated region
    $region46: #{policy_forward.1} parent=1 // pred_check
      _
    $region47: #{policy_forward.1} parent=1 // pred_check_branch
      %89 = sbr.rel (0) target = $region49
    $region48: #{policy_forward.1} parent=1 // pred_region
      %91 = dma.done [#allocation6], 2048
    $region49: #{policy_forward.1} parent=1 // pred_fallthru
      _
    // Predicated region
    $region50: #{policy_forward.1} parent=1 // pred_check
      _
    $region51: #{policy_forward.1} parent=1 // pred_check_branch
      %93 = sbr.rel (0) target = $region53
    $region52: #{policy_forward.1} parent=1 // pred_region
      %95 = dma.done [#allocation9], 2048
    $region53: #{policy_forward.1} parent=1 // pred_fallthru
      _
    %v96 = vld [vmem:[%s0] sm:$0xff]
    %v97 = vld [vmem:[#allocation2] sm:$0xff]
    %v98 = vld [vmem:[#allocation2 + $0x8] sm:$0xff]
    %v99 = vld [vmem:[#allocation2 + $0x10] sm:$0xff]
    %v100 = vld [vmem:[#allocation2 + $0x18] sm:$0xff]
    %v101 = vld [vmem:[#allocation2 + $0x20] sm:$0xff]
    %v102 = vld [vmem:[#allocation2 + $0x28] sm:$0xff]
    %v103 = vld [vmem:[#allocation2 + $0x30] sm:$0xff]
    %v104 = vld [vmem:[#allocation2 + $0x38] sm:$0xff]
    %v105 = vld [vmem:[#allocation2 + $0x40] sm:$0xff]
    %v106 = vld [vmem:[#allocation2 + $0x48] sm:$0xff]
    %v107 = vld [vmem:[#allocation2 + $0x50] sm:$0xff]
    %v108 = vld [vmem:[#allocation2 + $0x58] sm:$0xff]
    %v109 = vld [vmem:[#allocation2 + $0x60] sm:$0xff]
    %v110 = vld [vmem:[#allocation2 + $0x68] sm:$0xff]
    %v111 = vld [vmem:[#allocation2 + $0x70] sm:$0xff]
    %v112 = vld [vmem:[#allocation2 + $0x78] sm:$0xff]
    %v113 = vld [vmem:[%s2] sm:$0x1]
    %v115 = vperm.slane %v113, 0
    %117 = vmatpush.msra.mxu0 %v112
    %118 = vmatpush.msra.mxu0 %v111
    %119 = vmatpush.msra.mxu0 %v110
    %120 = vmatpush.msra.mxu0 %v109
    %121 = vmatpush.msra.mxu0 %v108
    %122 = vmatpush.msra.mxu0 %v107
    %123 = vmatpush.msra.mxu0 %v106
    %124 = vmatpush.msra.mxu0 %v105
    %125 = vmatpush.msra.mxu0 %v104
    %126 = vmatpush.msra.mxu0 %v103
    %127 = vmatpush.msra.mxu0 %v102
    %128 = vmatpush.msra.mxu0 %v101
    %129 = vmatpush.msra.mxu0 %v100
    %130 = vmatpush.msra.mxu0 %v99
    %131 = vmatpush.msra.mxu0 %v98
    %132 = vmatpush.msra.mxu0 %v97
    %133 = vmatmul.f32.gmra.mxu0 %v96
    %v134 = vpop.f32.mrf.mxu0
    %v135 = vadd.f32 %v115, %v134
    %136 = vdwg.mxu0
    %v137 = vmax.f32 %v135, 0.0
    %v138 = vld [vmem:[#allocation5] sm:$0xff]
    %v139 = vld [vmem:[#allocation5 + $0x8] sm:$0xff]
    %v140 = vld [vmem:[#allocation5 + $0x10] sm:$0xff]
    %v141 = vld [vmem:[#allocation5 + $0x18] sm:$0xff]
    %v142 = vld [vmem:[#allocation5 + $0x20] sm:$0xff]
    %v143 = vld [vmem:[#allocation5 + $0x28] sm:$0xff]
    %v144 = vld [vmem:[#allocation5 + $0x30] sm:$0xff]
    %v145 = vld [vmem:[#allocation5 + $0x38] sm:$0xff]
    %v146 = vld [vmem:[#allocation5 + $0x40] sm:$0xff]
    %v147 = vld [vmem:[#allocation5 + $0x48] sm:$0xff]
    %v148 = vld [vmem:[#allocation5 + $0x50] sm:$0xff]
    %v149 = vld [vmem:[#allocation5 + $0x58] sm:$0xff]
    %v150 = vld [vmem:[#allocation5 + $0x60] sm:$0xff]
    %v151 = vld [vmem:[#allocation5 + $0x68] sm:$0xff]
    %v152 = vld [vmem:[#allocation5 + $0x70] sm:$0xff]
    %v153 = vld [vmem:[#allocation5 + $0x78] sm:$0xff]
    %v154 = vld [vmem:[%s4] sm:$0x1]
    %v156 = vperm.slane %v154, 0
    %158 = vmatpush.msra.mxu0 %v153
    %159 = vmatpush.msra.mxu0 %v152
    %160 = vmatpush.msra.mxu0 %v151
    %161 = vmatpush.msra.mxu0 %v150
    %162 = vmatpush.msra.mxu0 %v149
    %163 = vmatpush.msra.mxu0 %v148
    %164 = vmatpush.msra.mxu0 %v147
    %165 = vmatpush.msra.mxu0 %v146
    %166 = vmatpush.msra.mxu0 %v145
    %167 = vmatpush.msra.mxu0 %v144
    %168 = vmatpush.msra.mxu0 %v143
    %169 = vmatpush.msra.mxu0 %v142
    %170 = vmatpush.msra.mxu0 %v141
    %171 = vmatpush.msra.mxu0 %v140
    %172 = vmatpush.msra.mxu0 %v139
    %173 = vmatpush.msra.mxu0 %v138
    %174 = vmatmul.f32.gmra.mxu0 %v137
    %v175 = vpop.f32.mrf.mxu0
    %v176 = vadd.f32 %v156, %v175
    %177 = vdwg.mxu0
    %v178 = vmax.f32 %v176, 0.0
    %v179 = vld [vmem:[#allocation7] sm:$0xff]
    %v180 = vld [vmem:[#allocation7 + $0x8] sm:$0xff]
    %v181 = vld [vmem:[#allocation7 + $0x10] sm:$0xff]
    %v182 = vld [vmem:[#allocation7 + $0x18] sm:$0xff]
    %v183 = vld [vmem:[#allocation7 + $0x20] sm:$0xff]
    %v184 = vld [vmem:[#allocation7 + $0x28] sm:$0xff]
    %v185 = vld [vmem:[#allocation7 + $0x30] sm:$0xff]
    %v186 = vld [vmem:[#allocation7 + $0x38] sm:$0xff]
    %v187 = vld [vmem:[#allocation7 + $0x40] sm:$0xff]
    %v188 = vld [vmem:[#allocation7 + $0x48] sm:$0xff]
    %v189 = vld [vmem:[#allocation7 + $0x50] sm:$0xff]
    %v190 = vld [vmem:[#allocation7 + $0x58] sm:$0xff]
    %v191 = vld [vmem:[#allocation7 + $0x60] sm:$0xff]
    %v192 = vld [vmem:[#allocation7 + $0x68] sm:$0xff]
    %v193 = vld [vmem:[#allocation7 + $0x70] sm:$0xff]
    %v194 = vld [vmem:[#allocation7 + $0x78] sm:$0xff]
    %v195 = vld [vmem:[%s6] sm:$0x1]
    %v197 = vperm.slane %v195, 0
    %199 = vmatpush.msra.mxu0 %v194
    %200 = vmatpush.msra.mxu0 %v193
    %201 = vmatpush.msra.mxu0 %v192
    %202 = vmatpush.msra.mxu0 %v191
    %203 = vmatpush.msra.mxu0 %v190
    %204 = vmatpush.msra.mxu0 %v189
    %205 = vmatpush.msra.mxu0 %v188
    %206 = vmatpush.msra.mxu0 %v187
    %207 = vmatpush.msra.mxu0 %v186
    %208 = vmatpush.msra.mxu0 %v185
    %209 = vmatpush.msra.mxu0 %v184
    %210 = vmatpush.msra.mxu0 %v183
    %211 = vmatpush.msra.mxu0 %v182
    %212 = vmatpush.msra.mxu0 %v181
    %213 = vmatpush.msra.mxu0 %v180
    %214 = vmatpush.msra.mxu0 %v179
    %215 = vmatmul.f32.gmra.mxu0 %v178
    %v216 = vpop.f32.mrf.mxu0
    %v217 = vadd.f32 %v197, %v216
    %218 = vdwg.mxu0
    %v219 = vmax.f32 %v217, 0.0
    %v220 = vld [vmem:[#allocation8] sm:$0xff]
    %v221 = vld [vmem:[#allocation8 + $0x8] sm:$0xff]
    %v222 = vld [vmem:[#allocation8 + $0x10] sm:$0xff]
    %v223 = vld [vmem:[#allocation8 + $0x18] sm:$0xff]
    %v224 = vld [vmem:[#allocation8 + $0x20] sm:$0xff]
    %v225 = vld [vmem:[#allocation8 + $0x28] sm:$0xff]
    %v226 = vld [vmem:[#allocation8 + $0x30] sm:$0xff]
    %v227 = vld [vmem:[#allocation8 + $0x38] sm:$0xff]
    %v228 = vld [vmem:[#allocation8 + $0x40] sm:$0xff]
    %v229 = vld [vmem:[#allocation8 + $0x48] sm:$0xff]
    %v230 = vld [vmem:[#allocation8 + $0x50] sm:$0xff]
    %v231 = vld [vmem:[#allocation8 + $0x58] sm:$0xff]
    %v232 = vld [vmem:[#allocation8 + $0x60] sm:$0xff]
    %v233 = vld [vmem:[#allocation8 + $0x68] sm:$0xff]
    %v234 = vld [vmem:[#allocation8 + $0x70] sm:$0xff]
    %v235 = vld [vmem:[#allocation8 + $0x78] sm:$0xff]
    %v236 = vld [vmem:[%s8] sm:$0x1]
    %v238 = vperm.slane %v236, 0
    %240 = vmatpush.msra.mxu0 %v235
    %241 = vmatpush.msra.mxu0 %v234
    %242 = vmatpush.msra.mxu0 %v233
    %243 = vmatpush.msra.mxu0 %v232
    %244 = vmatpush.msra.mxu0 %v231
    %245 = vmatpush.msra.mxu0 %v230
    %246 = vmatpush.msra.mxu0 %v229
    %247 = vmatpush.msra.mxu0 %v228
    %248 = vmatpush.msra.mxu0 %v227
    %249 = vmatpush.msra.mxu0 %v226
    %250 = vmatpush.msra.mxu0 %v225
    %251 = vmatpush.msra.mxu0 %v224
    %252 = vmatpush.msra.mxu0 %v223
    %253 = vmatpush.msra.mxu0 %v222
    %254 = vmatpush.msra.mxu0 %v221
    %255 = vmatpush.msra.mxu0 %v220
    %256 = vmatmul.f32.gmra.mxu0 %v219
    %v257 = vpop.f32.mrf.mxu0
    %v258 = vadd.f32 %v238, %v257
    %259 = vdwg.mxu0
    %260 = vst [vmem:[#allocation10] sm:$0xff] %v258
    // Predicated region
    $region54: #{policy_forward.1} parent=1 // pred_check
      _
    $region55: #{policy_forward.1} parent=1 // pred_check_branch
      %262 = sbr.rel (0) target = $region57
    $region56: #{policy_forward.1} parent=1 // pred_region
      %264 = vsyncadd [#allocation4], 0
      %s266 = sshll.u32 [#allocation10], 4
      %s267 = int_to_ptr.vmem [resolvable:$true] %s266
      %s268 = sshll.u32 %s9, 4
      %s269 = int_to_ptr.hbm [resolvable:$true] %s268
      %271 = dma.vmem_to_hbm [thread:$0]  %s267, 128, %s269, [#allocation4]
    $region57: #{policy_forward.1} parent=1 // pred_fallthru
      _
    // Predicated region
    $region58: #{policy_forward.1} parent=1 // pred_check
      _
    $region59: #{policy_forward.1} parent=1 // pred_check_branch
      %273 = sbr.rel (0) target = $region61
    $region60: #{policy_forward.1} parent=1 // pred_region
      %275 = dma.done [#allocation4], 128
    $region61: #{policy_forward.1} parent=1 // pred_fallthru
      _
    %276 = vsyncpa [#allocation3], 1
    %277 = vsyncpa [#allocation6], 1
    %278 = vsyncpa [#allocation9], 1
    %279 = vsyncpa [#allocation4], 1

</llo_original>
